<compile_context>
chip_gen: v5e
topology: v5e:2x2
jax: 0.10.0
libtpu: 0.0.40
codegen_flags: <defaults>
</compile_context>

<pallas_src>
import functools

import jax
import jax.numpy as jnp
from jax.experimental import pallas as pl
from jax.experimental.pallas import tpu as pltpu


def _logits_kernel(hc_ref, w1_ref, aux_ref, gamma_ref, beta_ref, w2t_ref,
                   b2_ref, out_ref, *, cout, n_pad, n_true, hw, eps, neg_slope):
    m = hw * n_pad

    hc = hc_ref[...]                                   # (Cin, M) bf16
    p_idx = aux_ref[0:1, :]                            # (1, M) int32: p = h*4 + w
    n_idx = aux_ref[1:2, :]                            # (1, M) int32: image index in block
    ow = jnp.bitwise_and(p_idx, 3)                     # column inside the 4x4 map

    # Validity of an output column for each tap offset (zero padding).
    h_ok = {-1: p_idx >= 4, 0: None, 1: p_idx <= 11}   # 0 <= oh + dh <= 3
    w_ok = {-1: ow >= 1, 0: None, 1: ow <= 2}          # 0 <= ow + dw <= 3

    # Conv2d(Cin, Cout, 3, stride=1, padding=1, bias=False) as 9 shifted
    # matmuls: out[:, j] = sum_taps w_tap @ hc[:, j + s_tap] (masked).  The
    # matmul is per-column, so rolling + masking the f32 tap output is
    # equivalent to shifting + masking the bf16 input.
    h1 = jnp.zeros((cout, m), jnp.float32)
    for dh in (-1, 0, 1):
        for dw in (-1, 0, 1):
            k = (dh + 1) * 3 + (dw + 1)                # = kh*3 + kw
            t = jnp.dot(w1_ref[k], hc, preferred_element_type=jnp.float32)
            s = (dh * 4 + dw) * n_pad                  # input col = output col + s
            if s:
                t = pltpu.roll(t, (-s) % m, axis=1)    # result[j] = t[j + s]
            mh, mw = h_ok[dh], w_ok[dw]
            if mh is not None and mw is not None:
                t = jnp.where(jnp.logical_and(mh, mw), t, 0.0)
            elif mh is not None:
                t = jnp.where(mh, t, 0.0)
            elif mw is not None:
                t = jnp.where(mw, t, 0.0)
            h1 = h1 + t

    # BatchNorm2d (training-mode batch stats, biased variance, eps=1e-5).
    # Two-pass in f32.  Zero-padded image columns of h1 are exactly zero, so
    # the mean over the TRUE column count is exact; the variance pass masks
    # the padded columns (they would otherwise contribute mean^2 terms).
    inv_m = 1.0 / float(hw * n_true)
    mean = jnp.sum(h1, axis=1, keepdims=True) * inv_m           # (Cout, 1)
    centered = h1 - mean
    valid = n_idx < n_true                                      # (1, M)
    var = jnp.sum(jnp.where(valid, centered * centered, 0.0),
                  axis=1, keepdims=True) * inv_m                # (Cout, 1)
    scale = gamma_ref[...] * jax.lax.rsqrt(var + eps)           # (Cout, 1)
    y = centered * scale + beta_ref[...]

    # LeakyReLU(0.2)
    y = jnp.where(y > 0, y, neg_slope * y)

    # Conv2d(Cout, 1, kernel_size=4, stride=4) on the 4x4 map: the channel
    # reduction rides the (heavily under-utilized) MXU; the per-image position
    # sum is 15 static (1, N) lane-slice adds of u's diagonal blocks.
    u = jnp.dot(w2t_ref[...], y, preferred_element_type=jnp.float32)  # (16, M)
    z = u[0:1, 0:n_pad]
    for p in range(1, hw):
        z = z + u[p:p + 1, p * n_pad:(p + 1) * n_pad]            # (1, Npad)

    out_ref[...] = jax.nn.sigmoid(z + b2_ref[0])                 # (1, Npad)


def logits_for_discriminator(h, c, params):
    """Forward pass of LogitsForDiscriminator(tDim, cDim, conditionCrit=True)."""
    w1, gamma, beta, w2, b2 = (params["w1"], params["gamma"], params["beta"],
                               params["w2"], params["b2"])
    n, t, hh, ww = h.shape
    assert (hh, ww) == (4, 4), "module implies a 4x4 feature map"
    cdim = c.shape[-1]
    cin = t + cdim
    cout = w1.shape[0]
    hw = hh * ww
    n_pad = ((n + 7) // 8) * 8            # lane axis 16*n_pad is a multiple of 128
    m = hw * n_pad

    # c.view(-1, cDim, 1, 1).repeat(1, 1, 4, 4); torch.cat((h, c), 1)
    c_map = jnp.broadcast_to(c.reshape(n, cdim, 1, 1), (n, cdim, hh, ww))
    hc = jnp.concatenate([h, c_map], axis=1)                    # (N, Cin, 4, 4)
    if n_pad != n:
        hc = jnp.pad(hc, ((0, n_pad - n), (0, 0), (0, 0), (0, 0)))

    # Transposed layout: rows = cin, cols = (p, n), p = h*4 + w.  bf16 halves
    # the dominant DMA stream; accumulation stays f32 in-kernel.
    hc_t = hc.transpose(1, 2, 3, 0).reshape(cin, m).astype(jnp.bfloat16)

    # Per-tap weight slabs, index k = kh*3 + kw.
    w1_taps = w1.transpose(2, 3, 0, 1).reshape(9, cout, cin).astype(jnp.bfloat16)
    # Second conv as (hw, Cout) so its channel reduction is a single matmul.
    w2_t = w2.reshape(cout, hw).T.astype(jnp.float32)           # (16, Cout)
    gamma2 = gamma.reshape(cout, 1).astype(jnp.float32)
    beta2 = beta.reshape(cout, 1).astype(jnp.float32)
    b2_s = b2.reshape(-1).astype(jnp.float32)                   # (1,) scalar -> SMEM

    # Column metadata: row 0 = position p, row 1 = image index within block.
    aux = jnp.stack([jnp.repeat(jnp.arange(hw, dtype=jnp.int32), n_pad),
                     jnp.tile(jnp.arange(n_pad, dtype=jnp.int32), hw)], axis=0)

    kernel = functools.partial(_logits_kernel, cout=cout, n_pad=n_pad,
                               n_true=n, hw=hw, eps=1e-5, neg_slope=0.2)
    out = pl.pallas_call(
        kernel,
        out_shape=jax.ShapeDtypeStruct((1, n_pad), jnp.float32),
        grid=(1,),
        in_specs=[
            pl.BlockSpec((cin, m), lambda i: (0, 0)),
            pl.BlockSpec((9, cout, cin), lambda i: (0, 0, 0)),
            pl.BlockSpec((2, m), lambda i: (0, 0)),
            pl.BlockSpec((cout, 1), lambda i: (0, 0)),
            pl.BlockSpec((cout, 1), lambda i: (0, 0)),
            pl.BlockSpec((hw, cout), lambda i: (0, 0)),
            pl.BlockSpec(memory_space=pltpu.MemorySpace.SMEM),
        ],
        out_specs=pl.BlockSpec((1, n_pad), lambda i: (0, 0)),
        compiler_params=pltpu.CompilerParams(
            dimension_semantics=("arbitrary",)),
    )(hc_t, w1_taps, aux, gamma2, beta2, w2_t, b2_s)
    return out[0, :n]                                           # output.view(-1)


def _reference(h, c, params):
    """Pure-JAX f32 reference mirroring the PyTorch forward (training-mode BN)."""
    n = h.shape[0]
    c_map = jnp.tile(c.reshape(n, -1, 1, 1), (1, 1, 4, 4))
    hc = jnp.concatenate([h, c_map], axis=1)
    y = jax.lax.conv_general_dilated(
        hc, params["w1"], (1, 1), ((1, 1), (1, 1)),
        dimension_numbers=("NCHW", "OIHW", "NCHW"))
    mean = jnp.mean(y, axis=(0, 2, 3), keepdims=True)
    var = jnp.mean(jnp.square(y - mean), axis=(0, 2, 3), keepdims=True)
    y = (y - mean) * jax.lax.rsqrt(var + 1e-5)
    y = y * params["gamma"].reshape(1, -1, 1, 1) + params["beta"].reshape(1, -1, 1, 1)
    y = jnp.where(y > 0, y, 0.2 * y)
    z = jax.lax.conv_general_dilated(
        y, params["w2"], (4, 4), "VALID",
        dimension_numbers=("NCHW", "OIHW", "NCHW"))
    z = z + params["b2"].reshape(1, 1, 1, 1)
    return jax.nn.sigmoid(z).reshape(-1)


if __name__ == "__main__":
    key = jax.random.PRNGKey(0)
    tDim, cDim, N = 4, 8, 2
    T = tDim * 8          # 32 channels after the first conv
    Cin = T + cDim        # 40 channels into the first conv
    ks = jax.random.split(key, 7)

    h = jax.random.normal(ks[0], (N, T, 4, 4), jnp.float32)
    c = jax.random.normal(ks[1], (N, cDim), jnp.float32)
    params = {
        "w1": 0.1 * jax.random.normal(ks[2], (T, Cin, 3, 3), jnp.float32),
        "gamma": 1.0 + 0.1 * jax.random.normal(ks[3], (T,), jnp.float32),
        "beta": 0.1 * jax.random.normal(ks[4], (T,), jnp.float32),
        "w2": 0.1 * jax.random.normal(ks[5], (1, T, 4, 4), jnp.float32),
        "b2": 0.1 * jax.random.normal(ks[6], (1,), jnp.float32),
    }

    out = jax.block_until_ready(logits_for_discriminator(h, c, params))
    ref = _reference(h, c, params)

    assert out.shape == (N,), out.shape
    assert out.dtype == jnp.float32
    # bf16 matmul operands (f32 accumulation) vs. the all-f32 reference.
    assert float(jnp.max(jnp.abs(out - ref))) < 1e-2, (out, ref)
    print("KERNEL_OK")
</pallas_src>

<mosaic_0001>
module attributes {stable_mosaic.version = 11 : i64} {
  func.func @_logits_kernel(%arg0: i32, %arg1: memref<40x128xbf16, #tpu.memory_space<vmem>>, %arg2: memref<9x32x40xbf16, #tpu.memory_space<vmem>>, %arg3: memref<2x128xi32, #tpu.memory_space<vmem>>, %arg4: memref<32x1xf32, #tpu.memory_space<vmem>>, %arg5: memref<32x1xf32, #tpu.memory_space<vmem>>, %arg6: memref<16x32xf32, #tpu.memory_space<vmem>>, %arg7: memref<1xf32, #tpu.memory_space<smem>>, %arg8: memref<1x8xf32, #tpu.memory_space<vmem>>) attributes {dimension_semantics = [#tpu.dimension_semantics<arbitrary>], iteration_bounds = array<i64: 1>, scalar_prefetch = 0 : i64, scratch_operands = 0 : i64, tpu.core_type = #tpu.core_type<tc>, window_params = [{pipeline_mode = #tpu.pipeline_mode<synchronous>, transform_indices = @transform_0, window_bounds = array<i64: 40, 128>}, {pipeline_mode = #tpu.pipeline_mode<synchronous>, transform_indices = @transform_1, window_bounds = array<i64: 9, 32, 40>}, {pipeline_mode = #tpu.pipeline_mode<synchronous>, transform_indices = @transform_2, window_bounds = array<i64: 2, 128>}, {pipeline_mode = #tpu.pipeline_mode<synchronous>, transform_indices = @transform_3, window_bounds = array<i64: 32, 1>}, {pipeline_mode = #tpu.pipeline_mode<synchronous>, transform_indices = @transform_4, window_bounds = array<i64: 32, 1>}, {pipeline_mode = #tpu.pipeline_mode<synchronous>, transform_indices = @transform_5, window_bounds = array<i64: 16, 32>}, {transform_indices = @transform_6, window_bounds = array<i64: 1>}, {pipeline_mode = #tpu.pipeline_mode<synchronous>, transform_indices = @transform_7, window_bounds = array<i64: 1, 8>}]} {
    %c0 = arith.constant 0 : index
    %c0_0 = arith.constant 0 : index
    %0 = vector.load %arg1[%c0, %c0_0] : memref<40x128xbf16, #tpu.memory_space<vmem>>, vector<40x128xbf16>
    %c0_1 = arith.constant 0 : index
    %c0_2 = arith.constant 0 : index
    %1 = vector.load %arg3[%c0_1, %c0_2] : memref<2x128xi32, #tpu.memory_space<vmem>>, vector<1x128xi32>
    %c1 = arith.constant 1 : index
    %c0_3 = arith.constant 0 : index
    %2 = vector.load %arg3[%c1, %c0_3] : memref<2x128xi32, #tpu.memory_space<vmem>>, vector<1x128xi32>
    %c3_i32 = arith.constant 3 : i32
    %3 = vector.broadcast %c3_i32 : i32 to vector<1x128xi32>
    %4 = arith.andi %1, %3 : vector<1x128xi32>
    %c4_i32 = arith.constant 4 : i32
    %5 = vector.broadcast %c4_i32 : i32 to vector<1x128xi32>
    %6 = arith.cmpi sge, %1, %5 : vector<1x128xi32>
    %c11_i32 = arith.constant 11 : i32
    %7 = vector.broadcast %c11_i32 : i32 to vector<1x128xi32>
    %8 = arith.cmpi sle, %1, %7 : vector<1x128xi32>
    %c1_i32 = arith.constant 1 : i32
    %9 = vector.broadcast %c1_i32 : i32 to vector<1x128xi32>
    %10 = arith.cmpi sge, %4, %9 : vector<1x128xi32>
    %c2_i32 = arith.constant 2 : i32
    %11 = vector.broadcast %c2_i32 : i32 to vector<1x128xi32>
    %12 = arith.cmpi sle, %4, %11 : vector<1x128xi32>
    %cst = arith.constant 0.000000e+00 : f32
    %13 = vector.broadcast %cst : f32 to vector<32x128xf32>
    %c0_4 = arith.constant 0 : index
    %c0_5 = arith.constant 0 : index
    %c0_6 = arith.constant 0 : index
    %14 = vector.load %arg2[%c0_4, %c0_5, %c0_6] : memref<9x32x40xbf16, #tpu.memory_space<vmem>>, vector<1x32x40xbf16>
    %15 = vector.shape_cast %14 : vector<1x32x40xbf16> to vector<32x40xbf16>
    %cst_7 = arith.constant dense<0.000000e+00> : vector<32x128xf32>
    %16 = tpu.matmul %15, %0, %cst_7 {dimension_numbers = #tpu.dot_dimension_numbers<[1], [0], [0], [1], [0, 0, 1, 1], [], []>} : vector<32x40xbf16>, vector<40x128xbf16>, vector<32x128xf32> -> vector<32x128xf32>
    %c40_i32 = arith.constant 40 : i32
    %17 = tpu.dynamic_rotate %16 by %c40_i32 dim 1 : vector<32x128xf32>, i32 -> vector<32x128xf32>
    %18 = arith.andi %6, %10 : vector<1x128xi1>
    %cst_8 = arith.constant 0.000000e+00 : f32
    %19 = vector.shape_cast %18 : vector<1x128xi1> to vector<1x128xi1>
    %20 = vector.broadcast %19 : vector<1x128xi1> to vector<32x128xi1>
    %21 = vector.broadcast %cst_8 : f32 to vector<32x128xf32>
    %22 = arith.select %20, %17, %21 : vector<32x128xi1>, vector<32x128xf32>
    %23 = arith.addf %13, %22 : vector<32x128xf32>
    %c1_9 = arith.constant 1 : index
    %c0_10 = arith.constant 0 : index
    %c0_11 = arith.constant 0 : index
    %24 = vector.load %arg2[%c1_9, %c0_10, %c0_11] : memref<9x32x40xbf16, #tpu.memory_space<vmem>>, vector<1x32x40xbf16>
    %25 = vector.shape_cast %24 : vector<1x32x40xbf16> to vector<32x40xbf16>
    %cst_12 = arith.constant dense<0.000000e+00> : vector<32x128xf32>
    %26 = tpu.matmul %25, %0, %cst_12 {dimension_numbers = #tpu.dot_dimension_numbers<[1], [0], [0], [1], [0, 0, 1, 1], [], []>} : vector<32x40xbf16>, vector<40x128xbf16>, vector<32x128xf32> -> vector<32x128xf32>
    %c32_i32 = arith.constant 32 : i32
    %27 = tpu.dynamic_rotate %26 by %c32_i32 dim 1 : vector<32x128xf32>, i32 -> vector<32x128xf32>
    %cst_13 = arith.constant 0.000000e+00 : f32
    %28 = vector.shape_cast %6 : vector<1x128xi1> to vector<1x128xi1>
    %29 = vector.broadcast %28 : vector<1x128xi1> to vector<32x128xi1>
    %30 = vector.broadcast %cst_13 : f32 to vector<32x128xf32>
    %31 = arith.select %29, %27, %30 : vector<32x128xi1>, vector<32x128xf32>
    %32 = arith.addf %23, %31 : vector<32x128xf32>
    %c2 = arith.constant 2 : index
    %c0_14 = arith.constant 0 : index
    %c0_15 = arith.constant 0 : index
    %33 = vector.load %arg2[%c2, %c0_14, %c0_15] : memref<9x32x40xbf16, #tpu.memory_space<vmem>>, vector<1x32x40xbf16>
    %34 = vector.shape_cast %33 : vector<1x32x40xbf16> to vector<32x40xbf16>
    %cst_16 = arith.constant dense<0.000000e+00> : vector<32x128xf32>
    %35 = tpu.matmul %34, %0, %cst_16 {dimension_numbers = #tpu.dot_dimension_numbers<[1], [0], [0], [1], [0, 0, 1, 1], [], []>} : vector<32x40xbf16>, vector<40x128xbf16>, vector<32x128xf32> -> vector<32x128xf32>
    %c24_i32 = arith.constant 24 : i32
    %36 = tpu.dynamic_rotate %35 by %c24_i32 dim 1 : vector<32x128xf32>, i32 -> vector<32x128xf32>
    %37 = arith.andi %6, %12 : vector<1x128xi1>
    %cst_17 = arith.constant 0.000000e+00 : f32
    %38 = vector.shape_cast %37 : vector<1x128xi1> to vector<1x128xi1>
    %39 = vector.broadcast %38 : vector<1x128xi1> to vector<32x128xi1>
    %40 = vector.broadcast %cst_17 : f32 to vector<32x128xf32>
    %41 = arith.select %39, %36, %40 : vector<32x128xi1>, vector<32x128xf32>
    %42 = arith.addf %32, %41 : vector<32x128xf32>
    %c3 = arith.constant 3 : index
    %c0_18 = arith.constant 0 : index
    %c0_19 = arith.constant 0 : index
    %43 = vector.load %arg2[%c3, %c0_18, %c0_19] : memref<9x32x40xbf16, #tpu.memory_space<vmem>>, vector<1x32x40xbf16>
    %44 = vector.shape_cast %43 : vector<1x32x40xbf16> to vector<32x40xbf16>
    %cst_20 = arith.constant dense<0.000000e+00> : vector<32x128xf32>
    %45 = tpu.matmul %44, %0, %cst_20 {dimension_numbers = #tpu.dot_dimension_numbers<[1], [0], [0], [1], [0, 0, 1, 1], [], []>} : vector<32x40xbf16>, vector<40x128xbf16>, vector<32x128xf32> -> vector<32x128xf32>
    %c8_i32 = arith.constant 8 : i32
    %46 = tpu.dynamic_rotate %45 by %c8_i32 dim 1 : vector<32x128xf32>, i32 -> vector<32x128xf32>
    %cst_21 = arith.constant 0.000000e+00 : f32
    %47 = vector.shape_cast %10 : vector<1x128xi1> to vector<1x128xi1>
    %48 = vector.broadcast %47 : vector<1x128xi1> to vector<32x128xi1>
    %49 = vector.broadcast %cst_21 : f32 to vector<32x128xf32>
    %50 = arith.select %48, %46, %49 : vector<32x128xi1>, vector<32x128xf32>
    %51 = arith.addf %42, %50 : vector<32x128xf32>
    %c4 = arith.constant 4 : index
    %c0_22 = arith.constant 0 : index
    %c0_23 = arith.constant 0 : index
    %52 = vector.load %arg2[%c4, %c0_22, %c0_23] : memref<9x32x40xbf16, #tpu.memory_space<vmem>>, vector<1x32x40xbf16>
    %53 = vector.shape_cast %52 : vector<1x32x40xbf16> to vector<32x40xbf16>
    %cst_24 = arith.constant dense<0.000000e+00> : vector<32x128xf32>
    %54 = tpu.matmul %53, %0, %cst_24 {dimension_numbers = #tpu.dot_dimension_numbers<[1], [0], [0], [1], [0, 0, 1, 1], [], []>} : vector<32x40xbf16>, vector<40x128xbf16>, vector<32x128xf32> -> vector<32x128xf32>
    %55 = arith.addf %51, %54 : vector<32x128xf32>
    %c5 = arith.constant 5 : index
    %c0_25 = arith.constant 0 : index
    %c0_26 = arith.constant 0 : index
    %56 = vector.load %arg2[%c5, %c0_25, %c0_26] : memref<9x32x40xbf16, #tpu.memory_space<vmem>>, vector<1x32x40xbf16>
    %57 = vector.shape_cast %56 : vector<1x32x40xbf16> to vector<32x40xbf16>
    %cst_27 = arith.constant dense<0.000000e+00> : vector<32x128xf32>
    %58 = tpu.matmul %57, %0, %cst_27 {dimension_numbers = #tpu.dot_dimension_numbers<[1], [0], [0], [1], [0, 0, 1, 1], [], []>} : vector<32x40xbf16>, vector<40x128xbf16>, vector<32x128xf32> -> vector<32x128xf32>
    %c120_i32 = arith.constant 120 : i32
    %59 = tpu.dynamic_rotate %58 by %c120_i32 dim 1 : vector<32x128xf32>, i32 -> vector<32x128xf32>
    %cst_28 = arith.constant 0.000000e+00 : f32
    %60 = vector.shape_cast %12 : vector<1x128xi1> to vector<1x128xi1>
    %61 = vector.broadcast %60 : vector<1x128xi1> to vector<32x128xi1>
    %62 = vector.broadcast %cst_28 : f32 to vector<32x128xf32>
    %63 = arith.select %61, %59, %62 : vector<32x128xi1>, vector<32x128xf32>
    %64 = arith.addf %55, %63 : vector<32x128xf32>
    %c6 = arith.constant 6 : index
    %c0_29 = arith.constant 0 : index
    %c0_30 = arith.constant 0 : index
    %65 = vector.load %arg2[%c6, %c0_29, %c0_30] : memref<9x32x40xbf16, #tpu.memory_space<vmem>>, vector<1x32x40xbf16>
    %66 = vector.shape_cast %65 : vector<1x32x40xbf16> to vector<32x40xbf16>
    %cst_31 = arith.constant dense<0.000000e+00> : vector<32x128xf32>
    %67 = tpu.matmul %66, %0, %cst_31 {dimension_numbers = #tpu.dot_dimension_numbers<[1], [0], [0], [1], [0, 0, 1, 1], [], []>} : vector<32x40xbf16>, vector<40x128xbf16>, vector<32x128xf32> -> vector<32x128xf32>
    %c104_i32 = arith.constant 104 : i32
    %68 = tpu.dynamic_rotate %67 by %c104_i32 dim 1 : vector<32x128xf32>, i32 -> vector<32x128xf32>
    %69 = arith.andi %8, %10 : vector<1x128xi1>
    %cst_32 = arith.constant 0.000000e+00 : f32
    %70 = vector.shape_cast %69 : vector<1x128xi1> to vector<1x128xi1>
    %71 = vector.broadcast %70 : vector<1x128xi1> to vector<32x128xi1>
    %72 = vector.broadcast %cst_32 : f32 to vector<32x128xf32>
    %73 = arith.select %71, %68, %72 : vector<32x128xi1>, vector<32x128xf32>
    %74 = arith.addf %64, %73 : vector<32x128xf32>
    %c7 = arith.constant 7 : index
    %c0_33 = arith.constant 0 : index
    %c0_34 = arith.constant 0 : index
    %75 = vector.load %arg2[%c7, %c0_33, %c0_34] : memref<9x32x40xbf16, #tpu.memory_space<vmem>>, vector<1x32x40xbf16>
    %76 = vector.shape_cast %75 : vector<1x32x40xbf16> to vector<32x40xbf16>
    %cst_35 = arith.constant dense<0.000000e+00> : vector<32x128xf32>
    %77 = tpu.matmul %76, %0, %cst_35 {dimension_numbers = #tpu.dot_dimension_numbers<[1], [0], [0], [1], [0, 0, 1, 1], [], []>} : vector<32x40xbf16>, vector<40x128xbf16>, vector<32x128xf32> -> vector<32x128xf32>
    %c96_i32 = arith.constant 96 : i32
    %78 = tpu.dynamic_rotate %77 by %c96_i32 dim 1 : vector<32x128xf32>, i32 -> vector<32x128xf32>
    %cst_36 = arith.constant 0.000000e+00 : f32
    %79 = vector.shape_cast %8 : vector<1x128xi1> to vector<1x128xi1>
    %80 = vector.broadcast %79 : vector<1x128xi1> to vector<32x128xi1>
    %81 = vector.broadcast %cst_36 : f32 to vector<32x128xf32>
    %82 = arith.select %80, %78, %81 : vector<32x128xi1>, vector<32x128xf32>
    %83 = arith.addf %74, %82 : vector<32x128xf32>
    %c8 = arith.constant 8 : index
    %c0_37 = arith.constant 0 : index
    %c0_38 = arith.constant 0 : index
    %84 = vector.load %arg2[%c8, %c0_37, %c0_38] : memref<9x32x40xbf16, #tpu.memory_space<vmem>>, vector<1x32x40xbf16>
    %85 = vector.shape_cast %84 : vector<1x32x40xbf16> to vector<32x40xbf16>
    %cst_39 = arith.constant dense<0.000000e+00> : vector<32x128xf32>
    %86 = tpu.matmul %85, %0, %cst_39 {dimension_numbers = #tpu.dot_dimension_numbers<[1], [0], [0], [1], [0, 0, 1, 1], [], []>} : vector<32x40xbf16>, vector<40x128xbf16>, vector<32x128xf32> -> vector<32x128xf32>
    %c88_i32 = arith.constant 88 : i32
    %87 = tpu.dynamic_rotate %86 by %c88_i32 dim 1 : vector<32x128xf32>, i32 -> vector<32x128xf32>
    %88 = arith.andi %8, %12 : vector<1x128xi1>
    %cst_40 = arith.constant 0.000000e+00 : f32
    %89 = vector.shape_cast %88 : vector<1x128xi1> to vector<1x128xi1>
    %90 = vector.broadcast %89 : vector<1x128xi1> to vector<32x128xi1>
    %91 = vector.broadcast %cst_40 : f32 to vector<32x128xf32>
    %92 = arith.select %90, %87, %91 : vector<32x128xi1>, vector<32x128xf32>
    %93 = arith.addf %83, %92 : vector<32x128xf32>
    %cst_41 = arith.constant dense<0.000000e+00> : vector<32xf32>
    %94 = vector.multi_reduction <add>, %93, %cst_41 [1] : vector<32x128xf32> to vector<32xf32>
    %95 = vector.shape_cast %94 : vector<32xf32> to vector<32x1xf32>
    %cst_42 = arith.constant 3.125000e-02 : f32
    %96 = vector.broadcast %cst_42 : f32 to vector<32x1xf32>
    %97 = arith.mulf %95, %96 : vector<32x1xf32>
    %98 = vector.broadcast %97 : vector<32x1xf32> to vector<32x128xf32>
    %99 = arith.subf %93, %98 : vector<32x128xf32>
    %c2_i32_43 = arith.constant 2 : i32
    %100 = vector.broadcast %c2_i32_43 : i32 to vector<1x128xi32>
    %101 = arith.cmpi slt, %2, %100 : vector<1x128xi32>
    %102 = arith.mulf %99, %99 : vector<32x128xf32>
    %cst_44 = arith.constant 0.000000e+00 : f32
    %103 = vector.shape_cast %101 : vector<1x128xi1> to vector<1x128xi1>
    %104 = vector.broadcast %103 : vector<1x128xi1> to vector<32x128xi1>
    %105 = vector.broadcast %cst_44 : f32 to vector<32x128xf32>
    %106 = arith.select %104, %102, %105 : vector<32x128xi1>, vector<32x128xf32>
    %cst_45 = arith.constant dense<0.000000e+00> : vector<32xf32>
    %107 = vector.multi_reduction <add>, %106, %cst_45 [1] : vector<32x128xf32> to vector<32xf32>
    %108 = vector.shape_cast %107 : vector<32xf32> to vector<32x1xf32>
    %cst_46 = arith.constant 3.125000e-02 : f32
    %109 = vector.broadcast %cst_46 : f32 to vector<32x1xf32>
    %110 = arith.mulf %108, %109 : vector<32x1xf32>
    %c0_47 = arith.constant 0 : index
    %c0_48 = arith.constant 0 : index
    %111 = vector.load %arg4[%c0_47, %c0_48] : memref<32x1xf32, #tpu.memory_space<vmem>>, vector<32x1xf32>
    %cst_49 = arith.constant 9.99999974E-6 : f32
    %112 = vector.broadcast %cst_49 : f32 to vector<32x1xf32>
    %113 = arith.addf %110, %112 : vector<32x1xf32>
    %114 = math.rsqrt %113 : vector<32x1xf32>
    %115 = arith.mulf %111, %114 : vector<32x1xf32>
    %116 = vector.broadcast %115 : vector<32x1xf32> to vector<32x128xf32>
    %117 = arith.mulf %99, %116 : vector<32x128xf32>
    %c0_50 = arith.constant 0 : index
    %c0_51 = arith.constant 0 : index
    %118 = vector.load %arg5[%c0_50, %c0_51] : memref<32x1xf32, #tpu.memory_space<vmem>>, vector<32x1xf32>
    %119 = vector.broadcast %118 : vector<32x1xf32> to vector<32x128xf32>
    %120 = arith.addf %117, %119 : vector<32x128xf32>
    %cst_52 = arith.constant 0.000000e+00 : f32
    %121 = vector.broadcast %cst_52 : f32 to vector<32x128xf32>
    %122 = arith.cmpf ogt, %120, %121 : vector<32x128xf32>
    %cst_53 = arith.constant 2.000000e-01 : f32
    %123 = vector.broadcast %cst_53 : f32 to vector<32x128xf32>
    %124 = arith.mulf %123, %120 : vector<32x128xf32>
    %125 = arith.select %122, %120, %124 : vector<32x128xi1>, vector<32x128xf32>
    %c0_54 = arith.constant 0 : index
    %c0_55 = arith.constant 0 : index
    %126 = vector.load %arg6[%c0_54, %c0_55] : memref<16x32xf32, #tpu.memory_space<vmem>>, vector<16x32xf32>
    %cst_56 = arith.constant dense<0.000000e+00> : vector<16x128xf32>
    %127 = tpu.matmul %126, %125, %cst_56 {dimension_numbers = #tpu.dot_dimension_numbers<[1], [0], [0], [1], [0, 0, 1, 1], [], []>} : vector<16x32xf32>, vector<32x128xf32>, vector<16x128xf32> -> vector<16x128xf32>
    %128 = vector.extract_strided_slice %127 {offsets = [0, 0], sizes = [1, 8], strides = [1, 1]} : vector<16x128xf32> to vector<1x8xf32>
    %129 = vector.extract_strided_slice %127 {offsets = [1, 8], sizes = [1, 8], strides = [1, 1]} : vector<16x128xf32> to vector<1x8xf32>
    %130 = arith.addf %128, %129 : vector<1x8xf32>
    %131 = vector.extract_strided_slice %127 {offsets = [2, 16], sizes = [1, 8], strides = [1, 1]} : vector<16x128xf32> to vector<1x8xf32>
    %132 = arith.addf %130, %131 : vector<1x8xf32>
    %133 = vector.extract_strided_slice %127 {offsets = [3, 24], sizes = [1, 8], strides = [1, 1]} : vector<16x128xf32> to vector<1x8xf32>
    %134 = arith.addf %132, %133 : vector<1x8xf32>
    %135 = vector.extract_strided_slice %127 {offsets = [4, 32], sizes = [1, 8], strides = [1, 1]} : vector<16x128xf32> to vector<1x8xf32>
    %136 = arith.addf %134, %135 : vector<1x8xf32>
    %137 = vector.extract_strided_slice %127 {offsets = [5, 40], sizes = [1, 8], strides = [1, 1]} : vector<16x128xf32> to vector<1x8xf32>
    %138 = arith.addf %136, %137 : vector<1x8xf32>
    %139 = vector.extract_strided_slice %127 {offsets = [6, 48], sizes = [1, 8], strides = [1, 1]} : vector<16x128xf32> to vector<1x8xf32>
    %140 = arith.addf %138, %139 : vector<1x8xf32>
    %141 = vector.extract_strided_slice %127 {offsets = [7, 56], sizes = [1, 8], strides = [1, 1]} : vector<16x128xf32> to vector<1x8xf32>
    %142 = arith.addf %140, %141 : vector<1x8xf32>
    %143 = vector.extract_strided_slice %127 {offsets = [8, 64], sizes = [1, 8], strides = [1, 1]} : vector<16x128xf32> to vector<1x8xf32>
    %144 = arith.addf %142, %143 : vector<1x8xf32>
    %145 = vector.extract_strided_slice %127 {offsets = [9, 72], sizes = [1, 8], strides = [1, 1]} : vector<16x128xf32> to vector<1x8xf32>
    %146 = arith.addf %144, %145 : vector<1x8xf32>
    %147 = vector.extract_strided_slice %127 {offsets = [10, 80], sizes = [1, 8], strides = [1, 1]} : vector<16x128xf32> to vector<1x8xf32>
    %148 = arith.addf %146, %147 : vector<1x8xf32>
    %149 = vector.extract_strided_slice %127 {offsets = [11, 88], sizes = [1, 8], strides = [1, 1]} : vector<16x128xf32> to vector<1x8xf32>
    %150 = arith.addf %148, %149 : vector<1x8xf32>
    %151 = vector.extract_strided_slice %127 {offsets = [12, 96], sizes = [1, 8], strides = [1, 1]} : vector<16x128xf32> to vector<1x8xf32>
    %152 = arith.addf %150, %151 : vector<1x8xf32>
    %153 = vector.extract_strided_slice %127 {offsets = [13, 104], sizes = [1, 8], strides = [1, 1]} : vector<16x128xf32> to vector<1x8xf32>
    %154 = arith.addf %152, %153 : vector<1x8xf32>
    %155 = vector.extract_strided_slice %127 {offsets = [14, 112], sizes = [1, 8], strides = [1, 1]} : vector<16x128xf32> to vector<1x8xf32>
    %156 = arith.addf %154, %155 : vector<1x8xf32>
    %157 = vector.extract_strided_slice %127 {offsets = [15, 120], sizes = [1, 8], strides = [1, 1]} : vector<16x128xf32> to vector<1x8xf32>
    %158 = arith.addf %156, %157 : vector<1x8xf32>
    %c0_57 = arith.constant 0 : index
    %159 = memref.load %arg7[%c0_57] : memref<1xf32, #tpu.memory_space<smem>>
    %160 = vector.broadcast %159 : f32 to vector<1x8xf32>
    %161 = arith.addf %158, %160 : vector<1x8xf32>
    %162 = arith.negf %161 : vector<1x8xf32>
    %163 = math.exp %162 : vector<1x8xf32>
    %cst_58 = arith.constant 1.000000e+00 : f32
    %164 = vector.broadcast %cst_58 : f32 to vector<1x8xf32>
    %165 = arith.addf %164, %163 : vector<1x8xf32>
    %166 = arith.divf %164, %165 : vector<1x8xf32>
    %c0_59 = arith.constant 0 : index
    %c0_60 = arith.constant 0 : index
    %167 = vector.load %arg8[%c0_59, %c0_60] : memref<1x8xf32, #tpu.memory_space<vmem>>, vector<1x8xf32>
    tpu.vector_store %arg8[%c0_59, %c0_60], %166 {strides = array<i32>} : memref<1x8xf32, #tpu.memory_space<vmem>>, vector<1x8xf32>,
    return
  }
  func.func @transform_0(%arg0: i32) -> (i32, i32) {
    %c0_i32 = arith.constant 0 : i32
    %c0_i32_0 = arith.constant 0 : i32
    %c0_i32_1 = arith.constant 0 : i32
    return %c0_i32, %c0_i32_0 : i32, i32
  }
  func.func @transform_1(%arg0: i32) -> (i32, i32, i32) {
    %c0_i32 = arith.constant 0 : i32
    %c0_i32_0 = arith.constant 0 : i32
    %c0_i32_1 = arith.constant 0 : i32
    %c0_i32_2 = arith.constant 0 : i32
    return %c0_i32, %c0_i32_0, %c0_i32_1 : i32, i32, i32
  }
  func.func @transform_2(%arg0: i32) -> (i32, i32) {
    %c0_i32 = arith.constant 0 : i32
    %c0_i32_0 = arith.constant 0 : i32
    %c0_i32_1 = arith.constant 0 : i32
    return %c0_i32, %c0_i32_0 : i32, i32
  }
  func.func @transform_3(%arg0: i32) -> (i32, i32) {
    %c0_i32 = arith.constant 0 : i32
    %c0_i32_0 = arith.constant 0 : i32
    %c0_i32_1 = arith.constant 0 : i32
    return %c0_i32, %c0_i32_0 : i32, i32
  }
  func.func @transform_4(%arg0: i32) -> (i32, i32) {
    %c0_i32 = arith.constant 0 : i32
    %c0_i32_0 = arith.constant 0 : i32
    %c0_i32_1 = arith.constant 0 : i32
    return %c0_i32, %c0_i32_0 : i32, i32
  }
  func.func @transform_5(%arg0: i32) -> (i32, i32) {
    %c0_i32 = arith.constant 0 : i32
    %c0_i32_0 = arith.constant 0 : i32
    %c0_i32_1 = arith.constant 0 : i32
    return %c0_i32, %c0_i32_0 : i32, i32
  }
  func.func @transform_6(%arg0: i32) -> i32 {
    %c0_i32 = arith.constant 0 : i32
    %c0_i32_0 = arith.constant 0 : i32
    return %c0_i32 : i32
  }
  func.func @transform_7(%arg0: i32) -> (i32, i32) {
    %c0_i32 = arith.constant 0 : i32
    %c0_i32_0 = arith.constant 0 : i32
    %c0_i32_1 = arith.constant 0 : i32
    return %c0_i32, %c0_i32_0 : i32, i32
  }
}

</mosaic_0001>

<llo_original>
// kernel: tpu_custom_call.1
$region0: #{tpu_custom_call.1}
  #allocation0 [shape = 'u32[]', space=smem, size = 0x4, offset = 0x4, fixed_abs, tag = 'smem constant byte address 0x4 - core index']
  #allocation1 [shape = 'u32[72,128]{1,0:T(1,128)}', space=vmem, size = 0x9000, scoped, tag = 'internal scratch']
  #allocation2 [shape = 'f32[1]{0:T(128)S(6)}', space=smem, size = 0x200, scoped, tag = 'scoped memory for tpu_custom_call.1']
  %s0 = inlined_call_operand.vmem [shape: bf16[40,128], index: 0, kind: input, shape index: {}]
  %s1 = inlined_call_operand.hbm [shape: bf16[9,32,40], index: 1, kind: input, shape index: {}]
  %s2 = inlined_call_operand.vmem [shape: s32[2,128], index: 2, kind: input, shape index: {}]
  %s3 = inlined_call_operand.vmem [shape: f32[32,1], index: 3, kind: input, shape index: {}]
  %s4 = inlined_call_operand.vmem [shape: f32[32,1], index: 4, kind: input, shape index: {}]
  %s5 = inlined_call_operand.vmem [shape: f32[16,32], index: 5, kind: input, shape index: {}]
  %s6 = inlined_call_operand.<no memory space> [shape: f32[1], index: 6, kind: input, shape index: {}]
  %s7 = inlined_call_operand.hbm [shape: f32[1,8], index: 7, kind: output, shape index: {}]
  %s8 = sld [smem:[#allocation0]]
  $region42: #{tpu_custom_call.1} parent=0
    _
  %s10 = ssub.s32 1, %s8
  %s11 = scalar_select 0, %s10, %s8
  %12 = sst [smem:[#allocation2]] %s6
  $region1: #{tpu_custom_call.1} parent=0
    #allocation3 [shape = 'u8[73728]{0}', space=vmem, size = 0x12000, scoped, tag = 'input window, operand 1, single buffered']
    #allocation4 [shape = 's32[1]{0}', space=sflag, size = 0x4, scoped, tag = 'scoped memory for tpu_custom_call.1']
    #allocation5 [shape = 's32[1]{0}', space=sflag, size = 0x4, scoped, tag = 'scoped memory for tpu_custom_call.1']
    #allocation6 [shape = 'u8[512]{0}', space=vmem, size = 0x400, scoped, tag = 'output window, operand 0, single buffered']
    %13 = vsyncpa [#allocation4], 0
    %14 = vsyncpa [#allocation5], 0
    // Predicated region
    $region2: #{tpu_custom_call.1} parent=1 // pred_check
      _
    $region3: #{tpu_custom_call.1} parent=1 // pred_check_branch
      %16 = sbr.rel (0) target = $region5
    $region4: #{tpu_custom_call.1} parent=1 // pred_region
      _
    $region5: #{tpu_custom_call.1} parent=1 // pred_fallthru
      _
    // Predicated region
    $region6: #{tpu_custom_call.1} parent=1 // pred_check
      _
    $region7: #{tpu_custom_call.1} parent=1 // pred_check_branch
      %18 = sbr.rel (0) target = $region9
    $region8: #{tpu_custom_call.1} parent=1 // pred_region
      %20 = vsyncadd [#allocation4], 0
      %s21 = sshll.u32 %s1, 4
      %s22 = int_to_ptr.hbm [resolvable:$true] %s21
      %s23 = sshll.u32 [#allocation3], 4
      %s24 = int_to_ptr.vmem [resolvable:$true] %s23
      %29 = dma.hbm_to_vmem [thread:$0]  %s22, 2304, %s24, [#allocation4], 64, 64, 4
    $region9: #{tpu_custom_call.1} parent=1 // pred_fallthru
      _
    // Predicated region
    $region10: #{tpu_custom_call.1} parent=1 // pred_check
      _
    $region11: #{tpu_custom_call.1} parent=1 // pred_check_branch
      %31 = sbr.rel (0) target = $region13
    $region12: #{tpu_custom_call.1} parent=1 // pred_region
      _
    $region13: #{tpu_custom_call.1} parent=1 // pred_fallthru
      _
    // Predicated region
    $region14: #{tpu_custom_call.1} parent=1 // pred_check
      _
    $region15: #{tpu_custom_call.1} parent=1 // pred_check_branch
      %33 = sbr.rel (0) target = $region17
    $region16: #{tpu_custom_call.1} parent=1 // pred_region
      _
    $region17: #{tpu_custom_call.1} parent=1 // pred_fallthru
      _
    // Predicated region
    $region18: #{tpu_custom_call.1} parent=1 // pred_check
      _
    $region19: #{tpu_custom_call.1} parent=1 // pred_check_branch
      %35 = sbr.rel (0) target = $region21
    $region20: #{tpu_custom_call.1} parent=1 // pred_region
      _
    $region21: #{tpu_custom_call.1} parent=1 // pred_fallthru
      _
    // Predicated region
    $region22: #{tpu_custom_call.1} parent=1 // pred_check
      _
    $region23: #{tpu_custom_call.1} parent=1 // pred_check_branch
      %37 = sbr.rel (0) target = $region25
    $region24: #{tpu_custom_call.1} parent=1 // pred_region
      _
    $region25: #{tpu_custom_call.1} parent=1 // pred_fallthru
      _
    // Predicated region
    $region26: #{tpu_custom_call.1} parent=1 // pred_check
      _
    $region27: #{tpu_custom_call.1} parent=1 // pred_check_branch
      %39 = sbr.rel (0) target = $region29
    $region28: #{tpu_custom_call.1} parent=1 // pred_region
      _
    $region29: #{tpu_custom_call.1} parent=1 // pred_fallthru
      _
    // Predicated region
    $region30: #{tpu_custom_call.1} parent=1 // pred_check
      _
    $region31: #{tpu_custom_call.1} parent=1 // pred_check_branch
      %41 = sbr.rel (0) target = $region33
    $region32: #{tpu_custom_call.1} parent=1 // pred_region
      %43 = dma.done [#allocation4], 2304
    $region33: #{tpu_custom_call.1} parent=1 // pred_fallthru
      _
    %v45 = vld [vmem:[%s0] sm:$0xf]
    %v46 = vld [vmem:[%s0 + $0x4] sm:$0xf]
    %v47 = vld [vmem:[%s0 + $0x8] sm:$0xf]
    %v48 = vld [vmem:[%s0 + $0xc] sm:$0xf]
    %v49 = vld [vmem:[%s0 + $0x10] sm:$0xf]
    %v50 = vld [vmem:[%s2] sm:$0x1]
    %v51 = vld [vmem:[%s2 + $0x1] sm:$0x1]
    %v52 = vand.u32 %v50, 3
    %vm53 = vcmp.ge.s32.totalorder %v50, 4
    %vm54 = vcmp.le.s32.totalorder %v50, 11
    %vm55 = vcmp.ge.s32.totalorder %v52, 1
    %vm56 = vcmp.le.s32.totalorder %v52, 2
    %v57 = vld [vmem:[#allocation3] sm:$0xf]
    %v58 = vld [vmem:[#allocation3 + $0x4] sm:$0xf]
    %v59 = vld [vmem:[#allocation3 + $0x8] sm:$0xf]
    %v60 = vld [vmem:[#allocation3 + $0xc] sm:$0xf]
    %v65 = vunpack.c.l.b16 %v57
    %v66 = vunpack.c.l.b16 %v58
    %v67 = vunpack.c.l.b16 %v59
    %v68 = vunpack.c.l.b16 %v60
    %v69 = vpack.c.b16 %v66, %v65
    %v70 = vpack.c.b16 %v68, %v67
    %v76 = vunpack.c.l.b16 %v45
    %v77 = vunpack.c.l.b16 %v46
    %v78 = vunpack.c.l.b16 %v47
    %v79 = vunpack.c.l.b16 %v48
    %v80 = vunpack.c.l.b16 %v49
    %v81 = vpack.c.b16 %v77, %v76
    %v82 = vpack.c.b16 %v79, %v78
    %v83 = vpack.c.b16 %v80, %v80
    %vm86 = vcmask 326656
    %v88 = vsel %vm86, %v69, 0
    %v91 = vsel %vm86, %v70, 0
    %vm93 = vcmask 1043456
    %v95 = vsel %vm93, %v83, 0
    %97 = vmatpush.bf16.msra.mxu0 0
    %98 = vmatpush.bf16.msra.mxu0 0
    %99 = vmatpush.bf16.msra.mxu0 0
    %100 = vmatpush.bf16.msra.mxu0 0
    %101 = vmatpush.bf16.msra.mxu0 0
    %102 = vmatpush.bf16.msra.mxu0 %v95
    %103 = vmatpush.bf16.msra.mxu0 %v82
    %104 = vmatpush.bf16.msra.mxu0 %v81
    %105 = vmatmul.bf16.gmra.mxu0 %v88
    %v106 = vpop.f32.mrf.mxu0
    %v107 = vadd.f32 0.0, %v106
    %v108 = vpop.f32.mrf.mxu0
    %v109 = vadd.f32 0.0, %v108
    %110 = vmatmul.bf16.gmra.mxu0 %v91
    %v111 = vpop.f32.mrf.mxu0
    %v112 = vadd.f32 0.0, %v111
    %v113 = vpop.f32.mrf.mxu0
    %v114 = vadd.f32 0.0, %v113
    %115 = vdwg.mxu0
    %116 = vrot.lane.b32.xlu0 %v107, 40
    %v117 = vpop.permute.xlu0 %116
    %118 = vrot.lane.b32.xlu0 %v109, 40
    %v119 = vpop.permute.xlu0 %118
    %120 = vrot.lane.b32.xlu0 %v112, 40
    %v121 = vpop.permute.xlu0 %120
    %122 = vrot.lane.b32.xlu0 %v114, 40
    %v123 = vpop.permute.xlu0 %122
    %vm124 = vmand %vm53, %vm55
    %v125 = vsel %vm124, 1, 0
    %v126 = vperm.slane %v125, 0
    %vm127 = vcmp.eq.s32.totalorder %v126, 1
    %v128 = vsel %vm127, %v117, 0.0
    %v129 = vsel %vm127, %v119, 0.0
    %v130 = vsel %vm127, %v121, 0.0
    %v131 = vsel %vm127, %v123, 0.0
    %v132 = vadd.f32 %v128, 0.0
    %v133 = vadd.f32 %v129, 0.0
    %v134 = vadd.f32 %v130, 0.0
    %v135 = vadd.f32 %v131, 0.0
    %s136 = scalar_lea.vmem [#allocation3], 16
    %v137 = vld [vmem:[%s136] sm:$0xf]
    %v138 = vld [vmem:[%s136 + $0x4] sm:$0xf]
    %v139 = vld [vmem:[%s136 + $0x8] sm:$0xf]
    %v140 = vld [vmem:[%s136 + $0xc] sm:$0xf]
    %v145 = vunpack.c.l.b16 %v137
    %v146 = vunpack.c.l.b16 %v138
    %v147 = vunpack.c.l.b16 %v139
    %v148 = vunpack.c.l.b16 %v140
    %v149 = vpack.c.b16 %v146, %v145
    %v150 = vpack.c.b16 %v148, %v147
    %v152 = vsel %vm86, %v149, 0
    %v155 = vsel %vm86, %v150, 0
    %157 = vmatpush.bf16.msra.mxu0 0
    %158 = vmatpush.bf16.msra.mxu0 0
    %159 = vmatpush.bf16.msra.mxu0 0
    %160 = vmatpush.bf16.msra.mxu0 0
    %161 = vmatpush.bf16.msra.mxu0 0
    %162 = vmatpush.bf16.msra.mxu0 %v95
    %163 = vmatpush.bf16.msra.mxu0 %v82
    %164 = vmatpush.bf16.msra.mxu0 %v81
    %165 = vmatmul.bf16.gmra.mxu0 %v152
    %v166 = vpop.f32.mrf.mxu0
    %v167 = vadd.f32 0.0, %v166
    %v168 = vpop.f32.mrf.mxu0
    %v169 = vadd.f32 0.0, %v168
    %170 = vmatmul.bf16.gmra.mxu0 %v155
    %v171 = vpop.f32.mrf.mxu0
    %v172 = vadd.f32 0.0, %v171
    %v173 = vpop.f32.mrf.mxu0
    %v174 = vadd.f32 0.0, %v173
    %175 = vdwg.mxu0
    %176 = vrot.lane.b32.xlu0 %v167, 32
    %v177 = vpop.permute.xlu0 %176
    %178 = vrot.lane.b32.xlu0 %v169, 32
    %v179 = vpop.permute.xlu0 %178
    %180 = vrot.lane.b32.xlu0 %v172, 32
    %v181 = vpop.permute.xlu0 %180
    %182 = vrot.lane.b32.xlu0 %v174, 32
    %v183 = vpop.permute.xlu0 %182
    %v184 = vsel %vm53, 1, 0
    %v185 = vperm.slane %v184, 0
    %vm186 = vcmp.eq.s32.totalorder %v185, 1
    %v187 = vsel %vm186, %v177, 0.0
    %v188 = vsel %vm186, %v179, 0.0
    %v189 = vsel %vm186, %v181, 0.0
    %v190 = vsel %vm186, %v183, 0.0
    %v191 = vadd.f32 %v132, %v187
    %v192 = vadd.f32 %v133, %v188
    %v193 = vadd.f32 %v134, %v189
    %v194 = vadd.f32 %v135, %v190
    %s195 = scalar_lea.vmem [#allocation3], 32
    %v196 = vld [vmem:[%s195] sm:$0xf]
    %v197 = vld [vmem:[%s195 + $0x4] sm:$0xf]
    %v198 = vld [vmem:[%s195 + $0x8] sm:$0xf]
    %v199 = vld [vmem:[%s195 + $0xc] sm:$0xf]
    %v204 = vunpack.c.l.b16 %v196
    %v205 = vunpack.c.l.b16 %v197
    %v206 = vunpack.c.l.b16 %v198
    %v207 = vunpack.c.l.b16 %v199
    %v208 = vpack.c.b16 %v205, %v204
    %v209 = vpack.c.b16 %v207, %v206
    %v211 = vsel %vm86, %v208, 0
    %v214 = vsel %vm86, %v209, 0
    %216 = vmatpush.bf16.msra.mxu0 0
    %217 = vmatpush.bf16.msra.mxu0 0
    %218 = vmatpush.bf16.msra.mxu0 0
    %219 = vmatpush.bf16.msra.mxu0 0
    %220 = vmatpush.bf16.msra.mxu0 0
    %221 = vmatpush.bf16.msra.mxu0 %v95
    %222 = vmatpush.bf16.msra.mxu0 %v82
    %223 = vmatpush.bf16.msra.mxu0 %v81
    %224 = vmatmul.bf16.gmra.mxu0 %v211
    %v225 = vpop.f32.mrf.mxu0
    %v226 = vadd.f32 0.0, %v225
    %v227 = vpop.f32.mrf.mxu0
    %v228 = vadd.f32 0.0, %v227
    %229 = vmatmul.bf16.gmra.mxu0 %v214
    %v230 = vpop.f32.mrf.mxu0
    %v231 = vadd.f32 0.0, %v230
    %v232 = vpop.f32.mrf.mxu0
    %v233 = vadd.f32 0.0, %v232
    %234 = vdwg.mxu0
    %235 = vrot.lane.b32.xlu0 %v226, 24
    %v236 = vpop.permute.xlu0 %235
    %237 = vrot.lane.b32.xlu0 %v228, 24
    %v238 = vpop.permute.xlu0 %237
    %239 = vrot.lane.b32.xlu0 %v231, 24
    %v240 = vpop.permute.xlu0 %239
    %241 = vrot.lane.b32.xlu0 %v233, 24
    %v242 = vpop.permute.xlu0 %241
    %vm243 = vmand %vm53, %vm56
    %v244 = vsel %vm243, 1, 0
    %v245 = vperm.slane %v244, 0
    %vm246 = vcmp.eq.s32.totalorder %v245, 1
    %v247 = vsel %vm246, %v236, 0.0
    %v248 = vsel %vm246, %v238, 0.0
    %v249 = vsel %vm246, %v240, 0.0
    %v250 = vsel %vm246, %v242, 0.0
    %v251 = vadd.f32 %v191, %v247
    %v252 = vadd.f32 %v192, %v248
    %v253 = vadd.f32 %v193, %v249
    %v254 = vadd.f32 %v194, %v250
    %s255 = scalar_lea.vmem [#allocation3], 48
    %v256 = vld [vmem:[%s255] sm:$0xf]
    %v257 = vld [vmem:[%s255 + $0x4] sm:$0xf]
    %v258 = vld [vmem:[%s255 + $0x8] sm:$0xf]
    %v259 = vld [vmem:[%s255 + $0xc] sm:$0xf]
    %v264 = vunpack.c.l.b16 %v256
    %v265 = vunpack.c.l.b16 %v257
    %v266 = vunpack.c.l.b16 %v258
    %v267 = vunpack.c.l.b16 %v259
    %v268 = vpack.c.b16 %v265, %v264
    %v269 = vpack.c.b16 %v267, %v266
    %v271 = vsel %vm86, %v268, 0
    %v274 = vsel %vm86, %v269, 0
    %276 = vmatpush.bf16.msra.mxu0 0
    %277 = vmatpush.bf16.msra.mxu0 0
    %278 = vmatpush.bf16.msra.mxu0 0
    %279 = vmatpush.bf16.msra.mxu0 0
    %280 = vmatpush.bf16.msra.mxu0 0
    %281 = vmatpush.bf16.msra.mxu0 %v95
    %282 = vmatpush.bf16.msra.mxu0 %v82
    %283 = vmatpush.bf16.msra.mxu0 %v81
    %284 = vmatmul.bf16.gmra.mxu0 %v271
    %v285 = vpop.f32.mrf.mxu0
    %v286 = vadd.f32 0.0, %v285
    %v287 = vpop.f32.mrf.mxu0
    %v288 = vadd.f32 0.0, %v287
    %289 = vmatmul.bf16.gmra.mxu0 %v274
    %v290 = vpop.f32.mrf.mxu0
    %v291 = vadd.f32 0.0, %v290
    %v292 = vpop.f32.mrf.mxu0
    %v293 = vadd.f32 0.0, %v292
    %294 = vdwg.mxu0
    %295 = vrot.lane.b32.xlu0 %v286, 8
    %v296 = vpop.permute.xlu0 %295
    %297 = vrot.lane.b32.xlu0 %v288, 8
    %v298 = vpop.permute.xlu0 %297
    %299 = vrot.lane.b32.xlu0 %v291, 8
    %v300 = vpop.permute.xlu0 %299
    %301 = vrot.lane.b32.xlu0 %v293, 8
    %v302 = vpop.permute.xlu0 %301
    %v303 = vsel %vm55, 1, 0
    %v304 = vperm.slane %v303, 0
    %vm305 = vcmp.eq.s32.totalorder %v304, 1
    %v306 = vsel %vm305, %v296, 0.0
    %v307 = vsel %vm305, %v298, 0.0
    %v308 = vsel %vm305, %v300, 0.0
    %v309 = vsel %vm305, %v302, 0.0
    %v310 = vadd.f32 %v251, %v306
    %v311 = vadd.f32 %v252, %v307
    %v312 = vadd.f32 %v253, %v308
    %v313 = vadd.f32 %v254, %v309
    %s314 = scalar_lea.vmem [#allocation3], 64
    %v315 = vld [vmem:[%s314] sm:$0xf]
    %v316 = vld [vmem:[%s314 + $0x4] sm:$0xf]
    %v317 = vld [vmem:[%s314 + $0x8] sm:$0xf]
    %v318 = vld [vmem:[%s314 + $0xc] sm:$0xf]
    %v323 = vunpack.c.l.b16 %v315
    %v324 = vunpack.c.l.b16 %v316
    %v325 = vunpack.c.l.b16 %v317
    %v326 = vunpack.c.l.b16 %v318
    %v327 = vpack.c.b16 %v324, %v323
    %v328 = vpack.c.b16 %v326, %v325
    %v330 = vsel %vm86, %v327, 0
    %v333 = vsel %vm86, %v328, 0
    %335 = vmatpush.bf16.msra.mxu0 0
    %336 = vmatpush.bf16.msra.mxu0 0
    %337 = vmatpush.bf16.msra.mxu0 0
    %338 = vmatpush.bf16.msra.mxu0 0
    %339 = vmatpush.bf16.msra.mxu0 0
    %340 = vmatpush.bf16.msra.mxu0 %v95
    %341 = vmatpush.bf16.msra.mxu0 %v82
    %342 = vmatpush.bf16.msra.mxu0 %v81
    %343 = vmatmul.bf16.gmra.mxu0 %v330
    %v344 = vpop.f32.mrf.mxu0
    %v345 = vadd.f32 0.0, %v344
    %v346 = vpop.f32.mrf.mxu0
    %v347 = vadd.f32 0.0, %v346
    %348 = vmatmul.bf16.gmra.mxu0 %v333
    %v349 = vpop.f32.mrf.mxu0
    %v350 = vadd.f32 0.0, %v349
    %v351 = vpop.f32.mrf.mxu0
    %v352 = vadd.f32 0.0, %v351
    %353 = vdwg.mxu0
    %v354 = vadd.f32 %v310, %v345
    %v355 = vadd.f32 %v311, %v347
    %v356 = vadd.f32 %v312, %v350
    %v357 = vadd.f32 %v313, %v352
    %s358 = scalar_lea.vmem [#allocation3], 80
    %v359 = vld [vmem:[%s358] sm:$0xf]
    %v360 = vld [vmem:[%s358 + $0x4] sm:$0xf]
    %v361 = vld [vmem:[%s358 + $0x8] sm:$0xf]
    %v362 = vld [vmem:[%s358 + $0xc] sm:$0xf]
    %v367 = vunpack.c.l.b16 %v359
    %v368 = vunpack.c.l.b16 %v360
    %v369 = vunpack.c.l.b16 %v361
    %v370 = vunpack.c.l.b16 %v362
    %v371 = vpack.c.b16 %v368, %v367
    %v372 = vpack.c.b16 %v370, %v369
    %v374 = vsel %vm86, %v371, 0
    %v377 = vsel %vm86, %v372, 0
    %379 = vmatpush.bf16.msra.mxu0 0
    %380 = vmatpush.bf16.msra.mxu0 0
    %381 = vmatpush.bf16.msra.mxu0 0
    %382 = vmatpush.bf16.msra.mxu0 0
    %383 = vmatpush.bf16.msra.mxu0 0
    %384 = vmatpush.bf16.msra.mxu0 %v95
    %385 = vmatpush.bf16.msra.mxu0 %v82
    %386 = vmatpush.bf16.msra.mxu0 %v81
    %387 = vmatmul.bf16.gmra.mxu0 %v374
    %v388 = vpop.f32.mrf.mxu0
    %v389 = vadd.f32 0.0, %v388
    %v390 = vpop.f32.mrf.mxu0
    %v391 = vadd.f32 0.0, %v390
    %392 = vmatmul.bf16.gmra.mxu0 %v377
    %v393 = vpop.f32.mrf.mxu0
    %v394 = vadd.f32 0.0, %v393
    %v395 = vpop.f32.mrf.mxu0
    %v396 = vadd.f32 0.0, %v395
    %397 = vdwg.mxu0
    %398 = vrot.lane.b32.xlu0 %v389, 120
    %v399 = vpop.permute.xlu0 %398
    %400 = vrot.lane.b32.xlu0 %v391, 120
    %v401 = vpop.permute.xlu0 %400
    %402 = vrot.lane.b32.xlu0 %v394, 120
    %v403 = vpop.permute.xlu0 %402
    %404 = vrot.lane.b32.xlu0 %v396, 120
    %v405 = vpop.permute.xlu0 %404
    %v406 = vsel %vm56, 1, 0
    %v407 = vperm.slane %v406, 0
    %vm408 = vcmp.eq.s32.totalorder %v407, 1
    %v409 = vsel %vm408, %v399, 0.0
    %v410 = vsel %vm408, %v401, 0.0
    %v411 = vsel %vm408, %v403, 0.0
    %v412 = vsel %vm408, %v405, 0.0
    %v413 = vadd.f32 %v354, %v409
    %v414 = vadd.f32 %v355, %v410
    %v415 = vadd.f32 %v356, %v411
    %v416 = vadd.f32 %v357, %v412
    %s417 = scalar_lea.vmem [#allocation3], 96
    %v418 = vld [vmem:[%s417] sm:$0xf]
    %v419 = vld [vmem:[%s417 + $0x4] sm:$0xf]
    %v420 = vld [vmem:[%s417 + $0x8] sm:$0xf]
    %v421 = vld [vmem:[%s417 + $0xc] sm:$0xf]
    %v426 = vunpack.c.l.b16 %v418
    %v427 = vunpack.c.l.b16 %v419
    %v428 = vunpack.c.l.b16 %v420
    %v429 = vunpack.c.l.b16 %v421
    %v430 = vpack.c.b16 %v427, %v426
    %v431 = vpack.c.b16 %v429, %v428
    %v433 = vsel %vm86, %v430, 0
    %v436 = vsel %vm86, %v431, 0
    %438 = vmatpush.bf16.msra.mxu0 0
    %439 = vmatpush.bf16.msra.mxu0 0
    %440 = vmatpush.bf16.msra.mxu0 0
    %441 = vmatpush.bf16.msra.mxu0 0
    %442 = vmatpush.bf16.msra.mxu0 0
    %443 = vmatpush.bf16.msra.mxu0 %v95
    %444 = vmatpush.bf16.msra.mxu0 %v82
    %445 = vmatpush.bf16.msra.mxu0 %v81
    %446 = vmatmul.bf16.gmra.mxu0 %v433
    %v447 = vpop.f32.mrf.mxu0
    %v448 = vadd.f32 0.0, %v447
    %v449 = vpop.f32.mrf.mxu0
    %v450 = vadd.f32 0.0, %v449
    %451 = vmatmul.bf16.gmra.mxu0 %v436
    %v452 = vpop.f32.mrf.mxu0
    %v453 = vadd.f32 0.0, %v452
    %v454 = vpop.f32.mrf.mxu0
    %v455 = vadd.f32 0.0, %v454
    %456 = vdwg.mxu0
    %457 = vrot.lane.b32.xlu0 %v448, 104
    %v458 = vpop.permute.xlu0 %457
    %459 = vrot.lane.b32.xlu0 %v450, 104
    %v460 = vpop.permute.xlu0 %459
    %461 = vrot.lane.b32.xlu0 %v453, 104
    %v462 = vpop.permute.xlu0 %461
    %463 = vrot.lane.b32.xlu0 %v455, 104
    %v464 = vpop.permute.xlu0 %463
    %vm465 = vmand %vm54, %vm55
    %v466 = vsel %vm465, 1, 0
    %v467 = vperm.slane %v466, 0
    %vm468 = vcmp.eq.s32.totalorder %v467, 1
    %v469 = vsel %vm468, %v458, 0.0
    %v470 = vsel %vm468, %v460, 0.0
    %v471 = vsel %vm468, %v462, 0.0
    %v472 = vsel %vm468, %v464, 0.0
    %v473 = vadd.f32 %v413, %v469
    %v474 = vadd.f32 %v414, %v470
    %v475 = vadd.f32 %v415, %v471
    %v476 = vadd.f32 %v416, %v472
    %s477 = scalar_lea.vmem [#allocation3], 112
    %v478 = vld [vmem:[%s477] sm:$0xf]
    %v479 = vld [vmem:[%s477 + $0x4] sm:$0xf]
    %v480 = vld [vmem:[%s477 + $0x8] sm:$0xf]
    %v481 = vld [vmem:[%s477 + $0xc] sm:$0xf]
    %v486 = vunpack.c.l.b16 %v478
    %v487 = vunpack.c.l.b16 %v479
    %v488 = vunpack.c.l.b16 %v480
    %v489 = vunpack.c.l.b16 %v481
    %v490 = vpack.c.b16 %v487, %v486
    %v491 = vpack.c.b16 %v489, %v488
    %v493 = vsel %vm86, %v490, 0
    %v496 = vsel %vm86, %v491, 0
    %498 = vmatpush.bf16.msra.mxu0 0
    %499 = vmatpush.bf16.msra.mxu0 0
    %500 = vmatpush.bf16.msra.mxu0 0
    %501 = vmatpush.bf16.msra.mxu0 0
    %502 = vmatpush.bf16.msra.mxu0 0
    %503 = vmatpush.bf16.msra.mxu0 %v95
    %504 = vmatpush.bf16.msra.mxu0 %v82
    %505 = vmatpush.bf16.msra.mxu0 %v81
    %506 = vmatmul.bf16.gmra.mxu0 %v493
    %v507 = vpop.f32.mrf.mxu0
    %v508 = vadd.f32 0.0, %v507
    %v509 = vpop.f32.mrf.mxu0
    %v510 = vadd.f32 0.0, %v509
    %511 = vmatmul.bf16.gmra.mxu0 %v496
    %v512 = vpop.f32.mrf.mxu0
    %v513 = vadd.f32 0.0, %v512
    %v514 = vpop.f32.mrf.mxu0
    %v515 = vadd.f32 0.0, %v514
    %516 = vdwg.mxu0
    %517 = vrot.lane.b32.xlu0 %v508, 96
    %v518 = vpop.permute.xlu0 %517
    %519 = vrot.lane.b32.xlu0 %v510, 96
    %v520 = vpop.permute.xlu0 %519
    %521 = vrot.lane.b32.xlu0 %v513, 96
    %v522 = vpop.permute.xlu0 %521
    %523 = vrot.lane.b32.xlu0 %v515, 96
    %v524 = vpop.permute.xlu0 %523
    %v525 = vsel %vm54, 1, 0
    %v526 = vperm.slane %v525, 0
    %vm527 = vcmp.eq.s32.totalorder %v526, 1
    %v528 = vsel %vm527, %v518, 0.0
    %v529 = vsel %vm527, %v520, 0.0
    %v530 = vsel %vm527, %v522, 0.0
    %v531 = vsel %vm527, %v524, 0.0
    %v532 = vadd.f32 %v473, %v528
    %v533 = vadd.f32 %v474, %v529
    %v534 = vadd.f32 %v475, %v530
    %v535 = vadd.f32 %v476, %v531
    %s536 = scalar_lea.vmem [#allocation3], 128
    %v537 = vld [vmem:[%s536] sm:$0xf]
    %v538 = vld [vmem:[%s536 + $0x4] sm:$0xf]
    %v539 = vld [vmem:[%s536 + $0x8] sm:$0xf]
    %v540 = vld [vmem:[%s536 + $0xc] sm:$0xf]
    %v545 = vunpack.c.l.b16 %v537
    %v546 = vunpack.c.l.b16 %v538
    %v547 = vunpack.c.l.b16 %v539
    %v548 = vunpack.c.l.b16 %v540
    %v549 = vpack.c.b16 %v546, %v545
    %v550 = vpack.c.b16 %v548, %v547
    %v552 = vsel %vm86, %v549, 0
    %v555 = vsel %vm86, %v550, 0
    %557 = vmatpush.bf16.msra.mxu0 0
    %558 = vmatpush.bf16.msra.mxu0 0
    %559 = vmatpush.bf16.msra.mxu0 0
    %560 = vmatpush.bf16.msra.mxu0 0
    %561 = vmatpush.bf16.msra.mxu0 0
    %562 = vmatpush.bf16.msra.mxu0 %v95
    %563 = vmatpush.bf16.msra.mxu0 %v82
    %564 = vmatpush.bf16.msra.mxu0 %v81
    %565 = vmatmul.bf16.gmra.mxu0 %v552
    %v566 = vpop.f32.mrf.mxu0
    %v567 = vadd.f32 0.0, %v566
    %v568 = vpop.f32.mrf.mxu0
    %v569 = vadd.f32 0.0, %v568
    %570 = vmatmul.bf16.gmra.mxu0 %v555
    %v571 = vpop.f32.mrf.mxu0
    %v572 = vadd.f32 0.0, %v571
    %v573 = vpop.f32.mrf.mxu0
    %v574 = vadd.f32 0.0, %v573
    %575 = vdwg.mxu0
    %576 = vrot.lane.b32.xlu0 %v567, 88
    %v577 = vpop.permute.xlu0 %576
    %578 = vrot.lane.b32.xlu0 %v569, 88
    %v579 = vpop.permute.xlu0 %578
    %580 = vrot.lane.b32.xlu0 %v572, 88
    %v581 = vpop.permute.xlu0 %580
    %582 = vrot.lane.b32.xlu0 %v574, 88
    %v583 = vpop.permute.xlu0 %582
    %vm584 = vmand %vm54, %vm56
    %v585 = vsel %vm584, 1, 0
    %v586 = vperm.slane %v585, 0
    %vm587 = vcmp.eq.s32.totalorder %v586, 1
    %v588 = vsel %vm587, %v577, 0.0
    %v589 = vsel %vm587, %v579, 0.0
    %v590 = vsel %vm587, %v581, 0.0
    %v591 = vsel %vm587, %v583, 0.0
    %v592 = vadd.f32 %v532, %v588
    %v593 = vadd.f32 %v533, %v589
    %v594 = vadd.f32 %v534, %v590
    %v595 = vadd.f32 %v535, %v591
    %596 = vadd.xlane.f32.xlu0 %v592
    %v597 = vpop.xlane.xlu0 %596
    %598 = vadd.xlane.f32.xlu0 %v593
    %v599 = vpop.xlane.xlu0 %598
    %600 = vadd.xlane.f32.xlu0 %v594
    %v601 = vpop.xlane.xlu0 %600
    %602 = vadd.xlane.f32.xlu0 %v595
    %v603 = vpop.xlane.xlu0 %602
    %v604 = vmul.f32 %v597, 0.03125
    %v605 = vmul.f32 %v599, 0.03125
    %v606 = vmul.f32 %v601, 0.03125
    %v607 = vmul.f32 %v603, 0.03125
    %v608 = vsub.f32 %v592, %v604
    %v609 = vsub.f32 %v593, %v605
    %v610 = vsub.f32 %v594, %v606
    %v611 = vsub.f32 %v595, %v607
    %vm612 = vcmp.lt.s32.totalorder %v51, 2
    %v613 = vmul.f32 %v608, %v608
    %v614 = vmul.f32 %v609, %v609
    %v615 = vmul.f32 %v610, %v610
    %v616 = vmul.f32 %v611, %v611
    %v617 = vsel %vm612, 1, 0
    %v618 = vperm.slane %v617, 0
    %vm619 = vcmp.eq.s32.totalorder %v618, 1
    %v620 = vsel %vm619, %v613, 0.0
    %v621 = vsel %vm619, %v614, 0.0
    %v622 = vsel %vm619, %v615, 0.0
    %v623 = vsel %vm619, %v616, 0.0
    %624 = vadd.xlane.f32.xlu0 %v620
    %v625 = vpop.xlane.xlu0 %624
    %626 = vadd.xlane.f32.xlu0 %v621
    %v627 = vpop.xlane.xlu0 %626
    %628 = vadd.xlane.f32.xlu0 %v622
    %v629 = vpop.xlane.xlu0 %628
    %630 = vadd.xlane.f32.xlu0 %v623
    %v631 = vpop.xlane.xlu0 %630
    %v632 = vmul.f32 %v625, 0.03125
    %v633 = vmul.f32 %v627, 0.03125
    %v634 = vmul.f32 %v629, 0.03125
    %v635 = vmul.f32 %v631, 0.03125
    %v636 = vld [vmem:[%s3] sm:$0xff]
    %v637 = vld [vmem:[%s3 + $0x8] sm:$0xff]
    %v638 = vld [vmem:[%s3 + $0x10] sm:$0xff]
    %v639 = vld [vmem:[%s3 + $0x18] sm:$0xff]
    %v640 = vadd.f32 %v632, 1e-05
    %v641 = vadd.f32 %v633, 1e-05
    %v642 = vadd.f32 %v634, 1e-05
    %v643 = vadd.f32 %v635, 1e-05
    %v644 = vrsqrt.pop %v640
    %v645 = vmul.f32 %v644, %v640
    %v646 = vmul.f32 %v645, %v644
    %v647 = vmul.f32 0.5, %v646
    %v648 = vsub.f32 1.5, %v647
    %v649 = vmul.f32 %v644, %v648
    %vm650 = vweird.f32 %v640
    %vm651 = vweird.f32 %v644
    %vm652 = vmor %vm650, %vm651
    %v653 = vsel %vm652, %v644, %v649
    %v654 = vrsqrt.pop %v641
    %v655 = vmul.f32 %v654, %v641
    %v656 = vmul.f32 %v655, %v654
    %v657 = vmul.f32 0.5, %v656
    %v658 = vsub.f32 1.5, %v657
    %v659 = vmul.f32 %v654, %v658
    %vm660 = vweird.f32 %v641
    %vm661 = vweird.f32 %v654
    %vm662 = vmor %vm660, %vm661
    %v663 = vsel %vm662, %v654, %v659
    %v664 = vrsqrt.pop %v642
    %v665 = vmul.f32 %v664, %v642
    %v666 = vmul.f32 %v665, %v664
    %v667 = vmul.f32 0.5, %v666
    %v668 = vsub.f32 1.5, %v667
    %v669 = vmul.f32 %v664, %v668
    %vm670 = vweird.f32 %v642
    %vm671 = vweird.f32 %v664
    %vm672 = vmor %vm670, %vm671
    %v673 = vsel %vm672, %v664, %v669
    %v674 = vrsqrt.pop %v643
    %v675 = vmul.f32 %v674, %v643
    %v676 = vmul.f32 %v675, %v674
    %v677 = vmul.f32 0.5, %v676
    %v678 = vsub.f32 1.5, %v677
    %v679 = vmul.f32 %v674, %v678
    %vm680 = vweird.f32 %v643
    %vm681 = vweird.f32 %v674
    %vm682 = vmor %vm680, %vm681
    %v683 = vsel %vm682, %v674, %v679
    %v684 = vmul.f32 %v636, %v653
    %v685 = vmul.f32 %v637, %v663
    %v686 = vmul.f32 %v638, %v673
    %v687 = vmul.f32 %v639, %v683
    %689 = vset.pattern.permute.xlu0 0
    %690 = vperm.xlu0 %689, %v684
    %v691 = vpop.permute.xlu0 %690
    %694 = vset.pattern.permute.xlu0 0
    %695 = vperm.xlu0 %694, %v685
    %v696 = vpop.permute.xlu0 %695
    %699 = vset.pattern.permute.xlu0 0
    %700 = vperm.xlu0 %699, %v686
    %v701 = vpop.permute.xlu0 %700
    %704 = vset.pattern.permute.xlu0 0
    %705 = vperm.xlu0 %704, %v687
    %v706 = vpop.permute.xlu0 %705
    %v708 = vmul.f32 %v608, %v691
    %v709 = vmul.f32 %v609, %v696
    %v710 = vmul.f32 %v610, %v701
    %v711 = vmul.f32 %v611, %v706
    %v712 = vld [vmem:[%s4] sm:$0xff]
    %v713 = vld [vmem:[%s4 + $0x8] sm:$0xff]
    %v714 = vld [vmem:[%s4 + $0x10] sm:$0xff]
    %v715 = vld [vmem:[%s4 + $0x18] sm:$0xff]
    %717 = vset.pattern.permute.xlu0 0
    %718 = vperm.xlu0 %717, %v712
    %v719 = vpop.permute.xlu0 %718
    %722 = vset.pattern.permute.xlu0 0
    %723 = vperm.xlu0 %722, %v713
    %v724 = vpop.permute.xlu0 %723
    %727 = vset.pattern.permute.xlu0 0
    %728 = vperm.xlu0 %727, %v714
    %v729 = vpop.permute.xlu0 %728
    %732 = vset.pattern.permute.xlu0 0
    %733 = vperm.xlu0 %732, %v715
    %v734 = vpop.permute.xlu0 %733
    %v736 = vadd.f32 %v708, %v719
    %v737 = vadd.f32 %v709, %v724
    %v738 = vadd.f32 %v710, %v729
    %v739 = vadd.f32 %v711, %v734
    %vm740 = vcmp.gt.f32.partialorder %v736, 0.0
    %vm741 = vcmp.gt.f32.partialorder %v737, 0.0
    %vm742 = vcmp.gt.f32.partialorder %v738, 0.0
    %vm743 = vcmp.gt.f32.partialorder %v739, 0.0
    %v744 = vmul.f32 %v736, 0.2
    %v745 = vmul.f32 %v737, 0.2
    %v746 = vmul.f32 %v738, 0.2
    %v747 = vmul.f32 %v739, 0.2
    %v748 = vsel %vm740, %v736, %v744
    %v749 = vsel %vm741, %v737, %v745
    %v750 = vsel %vm742, %v738, %v746
    %v751 = vsel %vm743, %v739, %v747
    %v752 = vld [vmem:[%s5] sm:$0xff]
    %v753 = vld [vmem:[%s5 + $0x8] sm:$0xff]
    %vm754 = vcmask 261120
    %v756 = vsel %vm754, %v752, 0
    %v759 = vsel %vm754, %v753, 0
    %761 = vmatpush.msra.mxu0 0.0
    %762 = vmatpush.msra.mxu0 0.0
    %763 = vmatpush.msra.mxu0 0.0
    %764 = vmatpush.msra.mxu0 0.0
    %765 = vmatpush.msra.mxu0 0.0
    %766 = vmatpush.msra.mxu0 0.0
    %767 = vmatpush.msra.mxu0 0.0
    %768 = vmatpush.msra.mxu0 0.0
    %769 = vmatpush.msra.mxu0 0.0
    %770 = vmatpush.msra.mxu0 0.0
    %771 = vmatpush.msra.mxu0 0.0
    %772 = vmatpush.msra.mxu0 0.0
    %773 = vmatpush.msra.mxu0 %v751
    %774 = vmatpush.msra.mxu0 %v750
    %775 = vmatpush.msra.mxu0 %v749
    %776 = vmatpush.msra.mxu0 %v748
    %777 = vmatmul.f32.gmra.mxu0 %v756
    %v778 = vpop.f32.mrf.mxu0
    %v779 = vadd.f32 0.0, %v778
    %780 = vmatmul.f32.gmra.mxu0 %v759
    %v781 = vpop.f32.mrf.mxu0
    %v782 = vadd.f32 0.0, %v781
    %783 = vdwg.mxu0
    %v785 = vrot.slane %v779, 1
    %786 = vrot.lane.b32.xlu0 %v785, 120
    %v787 = vpop.permute.xlu0 %786
    %v789 = vadd.f32 %v779, %v787
    %v790 = vrot.slane %v779, 2
    %791 = vrot.lane.b32.xlu0 %v790, 112
    %v792 = vpop.permute.xlu0 %791
    %v794 = vadd.f32 %v789, %v792
    %v795 = vrot.slane %v779, 3
    %796 = vrot.lane.b32.xlu0 %v795, 104
    %v797 = vpop.permute.xlu0 %796
    %v799 = vadd.f32 %v794, %v797
    %v800 = vrot.slane %v779, 4
    %801 = vrot.lane.b32.xlu0 %v800, 96
    %v802 = vpop.permute.xlu0 %801
    %v804 = vadd.f32 %v799, %v802
    %v805 = vrot.slane %v779, 5
    %806 = vrot.lane.b32.xlu0 %v805, 88
    %v807 = vpop.permute.xlu0 %806
    %v809 = vadd.f32 %v804, %v807
    %v810 = vrot.slane %v779, 6
    %811 = vrot.lane.b32.xlu0 %v810, 80
    %v812 = vpop.permute.xlu0 %811
    %v814 = vadd.f32 %v809, %v812
    %v815 = vrot.slane %v779, 7
    %816 = vrot.lane.b32.xlu0 %v815, 72
    %v817 = vpop.permute.xlu0 %816
    %v819 = vadd.f32 %v814, %v817
    %821 = vrot.lane.b32.xlu0 %v782, 64
    %v822 = vpop.permute.xlu0 %821
    %v824 = vadd.f32 %v819, %v822
    %v825 = vrot.slane %v782, 1
    %826 = vrot.lane.b32.xlu0 %v825, 56
    %v827 = vpop.permute.xlu0 %826
    %v829 = vadd.f32 %v824, %v827
    %v830 = vrot.slane %v782, 2
    %831 = vrot.lane.b32.xlu0 %v830, 48
    %v832 = vpop.permute.xlu0 %831
    %v834 = vadd.f32 %v829, %v832
    %v835 = vrot.slane %v782, 3
    %836 = vrot.lane.b32.xlu0 %v835, 40
    %v837 = vpop.permute.xlu0 %836
    %v839 = vadd.f32 %v834, %v837
    %v840 = vrot.slane %v782, 4
    %841 = vrot.lane.b32.xlu0 %v840, 32
    %v842 = vpop.permute.xlu0 %841
    %v844 = vadd.f32 %v839, %v842
    %v845 = vrot.slane %v782, 5
    %846 = vrot.lane.b32.xlu0 %v845, 24
    %v847 = vpop.permute.xlu0 %846
    %v849 = vadd.f32 %v844, %v847
    %v850 = vrot.slane %v782, 6
    %851 = vrot.lane.b32.xlu0 %v850, 16
    %v852 = vpop.permute.xlu0 %851
    %v854 = vadd.f32 %v849, %v852
    %v855 = vrot.slane %v782, 7
    %856 = vrot.lane.b32.xlu0 %v855, 8
    %v857 = vpop.permute.xlu0 %856
    %v859 = vadd.f32 %v854, %v857
    %s860 = sld [smem:[#allocation2]]
    %v861 = vstv %s860
    %v862 = vadd.f32 %v859, %v861
    %v863 = vxor.u32 %v862, 2147483648
    %v864 = vmul.f32 %v863, 1.442695
    %v865 = vpow.pop %v864
    %v866 = vadd.f32 %v865, 1.0
    %v867 = vrcp.pop %v866
    %v868 = vmul.f32 %v866, %v867
    %v869 = vsub.f32 1.0, %v868
    %v870 = vmul.f32 %v867, %v869
    %v871 = vadd.f32 %v867, %v870
    %vm872 = vweird.f32 %v866
    %vm873 = vweird.f32 %v867
    %vm874 = vmor %vm872, %vm873
    %v875 = vsel %vm874, %v867, %v871
    %v876 = vand.u32 2147483647, %v866
    %vm877 = vcmp.eq.f32.partialorder %v876, 8.507059e+37
    %v878 = vand.u32 %v866, 2147483648
    %v879 = vor.u32 1.1754944e-38, %v878
    %v880 = vsel %vm877, %v879, %v875
    %v881 = vmul.f32 1.0, %v880
    %vm882 = vcmask 57344
    %883 = vst.msk [vmem:[#allocation6] sm:$0x1] %vm882, %v881
    // Predicated region
    $region34: #{tpu_custom_call.1} parent=1 // pred_check
      _
    $region35: #{tpu_custom_call.1} parent=1 // pred_check_branch
      %885 = sbr.rel (0) target = $region37
    $region36: #{tpu_custom_call.1} parent=1 // pred_region
      %887 = vsyncadd [#allocation5], 0
      %s889 = sshll.u32 [#allocation6], 4
      %s890 = int_to_ptr.vmem [resolvable:$true] %s889
      %s891 = sshll.u32 %s7, 4
      %s892 = int_to_ptr.hbm [resolvable:$true] %s891
      %894 = dma.vmem_to_hbm [thread:$0]  %s890, 16, %s892, [#allocation5]
    $region37: #{tpu_custom_call.1} parent=1 // pred_fallthru
      _
    // Predicated region
    $region38: #{tpu_custom_call.1} parent=1 // pred_check
      _
    $region39: #{tpu_custom_call.1} parent=1 // pred_check_branch
      %896 = sbr.rel (0) target = $region41
    $region40: #{tpu_custom_call.1} parent=1 // pred_region
      %898 = dma.done [#allocation5], 16
    $region41: #{tpu_custom_call.1} parent=1 // pred_fallthru
      _
    %899 = vsyncpa [#allocation4], 1
    %900 = vsyncpa [#allocation5], 1

</llo_original>
